<compile_context>
chip_gen: v7x
topology: tpu7x:2x2x1
jax: 0.10.0
libtpu: 0.0.40
codegen_flags: <defaults>
</compile_context>

<pallas_src>
import functools

import jax
import jax.numpy as jnp
from jax.experimental import pallas as pl
from jax.experimental.pallas import tpu as pltpu


def _round_up(x: int, m: int) -> int:
    return ((x + m - 1) // m) * m


# ----------------------------- Pallas kernel: resident-W matmul + bias ------------------------

def _conv_mm_kernel(p_ref, w_ref, b_ref, o_ref):
    """One (batch, L_out-tile) grid point.

    p_ref: (K*Ci, tl)  patches for this batch element / L_out tile
    w_ref: (Co, K*Ci)  resident flattened conv weight
    b_ref: (Co, 1)     resident bias
    o_ref: (Co, tl)    lane-dense output tile
    """
    acc = jnp.dot(w_ref[...], p_ref[...], preferred_element_type=jnp.float32)
    o_ref[...] = (acc + b_ref[...]).astype(o_ref.dtype)


def _conv1d_pallas(patches, w2d, b2d, *, tl):
    """patches: (N, K*Ci, L_out_p), w2d: (Co, K*Ci), b2d: (Co, 1) -> (N, Co, L_out_p) f32."""
    Nb, KCi, L_out_p = patches.shape
    Co = w2d.shape[0]
    assert L_out_p % tl == 0
    nL = L_out_p // tl
    isz = patches.dtype.itemsize

    # Per-step VMEM: double-buffered patches tile + resident W/b + double-buffered out tile.
    block_bytes = KCi * tl * isz + Co * KCi * isz + Co * 4 + Co * tl * 4
    vmem_limit = min(max(4 * block_bytes, 16 << 20), 48 << 20)  # generous, v7x-safe

    cost = pl.CostEstimate(
        flops=2 * Nb * L_out_p * KCi * Co,
        transcendentals=0,
        bytes_accessed=patches.size * isz + w2d.size * isz + b2d.size * 4
        + Nb * Co * L_out_p * 4,
    )

    return pl.pallas_call(
        _conv_mm_kernel,
        out_shape=jax.ShapeDtypeStruct((Nb, Co, L_out_p), jnp.float32),
        grid=(Nb, nL),
        in_specs=[
            # patches: batch dim squeezed, full (un-padded) K*Ci, L_out tiled in the lane dim.
            pl.BlockSpec((None, KCi, tl), lambda n, j: (n, 0, j)),
            # W and bias: full arrays, constant index map -> DMA'd once, VMEM-resident.
            pl.BlockSpec((Co, KCi), lambda n, j: (0, 0)),
            pl.BlockSpec((Co, 1), lambda n, j: (0, 0)),
        ],
        out_specs=pl.BlockSpec((None, Co, tl), lambda n, j: (n, 0, j)),
        compiler_params=pltpu.CompilerParams(
            dimension_semantics=("parallel", "parallel"),
            vmem_limit_bytes=vmem_limit,
        ),
        cost_estimate=cost,
    )(patches, w2d, b2d)


# -------------------------------- Conv1dBlock forward wrapper ---------------------------------

@functools.partial(jax.jit, static_argnames=("stride", "compute_dtype"))
def conv1d_block_forward(x, weight, bias, *, stride, compute_dtype=jnp.float32):
    """Conv1dBlock.forward: y = Conv1d(x) (no ReLU, matching the PyTorch module).

    x:      (N, C_in, L)         -- PyTorch NCL layout
    weight: (C_out, C_in, K)     -- PyTorch Conv1d weight layout
    bias:   (C_out,)
    returns (N, C_out, L_out), L_out = (L - K) // stride + 1

    compute_dtype=jnp.bfloat16 halves operand HBM/DMA bytes (f32 accumulation kept) at the
    cost of ~1e-2 relative divergence from PyTorch f32; default f32 matches exactly.
    """
    N, Ci, L = x.shape
    Co, Ciw, K = weight.shape
    assert Ciw == Ci
    L_out = (L - K) // stride + 1

    # L_out tile: full dim when it fits (no padding at all); otherwise a lane-dense multiple
    # of 128 with the output padded to a tile multiple (sliced off afterwards).
    if L_out <= 1024:
        tl = L_out
    else:
        tl = 512
    L_out_p = _round_up(L_out, tl)

    # Tap extraction (tap-major rows), kept in NCL layout -- K cheap strided slices + concat
    # that XLA fuses into a single write of the patch tensor; no transposes, no zero-padding
    # of the contraction dim.
    last = (L_out - 1) * stride
    patches = jnp.concatenate(
        [x[:, :, kk : kk + last + 1 : stride] for kk in range(K)], axis=1
    ).astype(compute_dtype)  # (N, K*Ci, L_out)
    if L_out_p != L_out:
        patches = jnp.pad(patches, ((0, 0), (0, 0), (0, L_out_p - L_out)))

    # Flatten weight to (Co, K*Ci) with the same (tap outer, channel inner) row ordering.
    w2d = jnp.transpose(weight, (0, 2, 1)).reshape(Co, K * Ci).astype(compute_dtype)
    b2d = bias.reshape(Co, 1).astype(jnp.float32)

    out = _conv1d_pallas(patches, w2d, b2d, tl=tl)  # (N, Co, L_out_p)
    if L_out_p != L_out:
        out = out[:, :, :L_out]
    return out


# --------------------------------------------- main -------------------------------------------

if __name__ == "__main__":
    key = jax.random.PRNGKey(0)
    kx, kw, kb = jax.random.split(key, 3)

    batch, in_channels, length = 2, 4, 16
    out_channels, kernel_size, stride = 32, 4, 2

    x = jax.random.normal(kx, (batch, in_channels, length), dtype=jnp.float32)
    # Deterministic synthetic params (PyTorch Conv1d default init range U(-s, s)).
    s = 1.0 / float(in_channels * kernel_size) ** 0.5
    weight = jax.random.uniform(
        kw, (out_channels, in_channels, kernel_size), jnp.float32, -s, s
    )
    bias = jax.random.uniform(kb, (out_channels,), jnp.float32, -s, s)

    out = conv1d_block_forward(x, weight, bias, stride=stride)
    out = jax.block_until_ready(out)

    l_out = (length - kernel_size) // stride + 1
    assert out.shape == (batch, out_channels, l_out)

    # Pure-JAX reference sanity check (same conv semantics as torch.nn.Conv1d, padding=0).
    ref = jax.lax.conv_general_dilated(
        x, weight, window_strides=(stride,), padding="VALID",
        dimension_numbers=("NCH", "OIH", "NCH"),
    ) + bias[None, :, None]
    assert jnp.allclose(out, ref, rtol=1e-3, atol=1e-3)

    print("KERNEL_OK")
</pallas_src>

<mosaic_0001>
module attributes {stable_mosaic.version = 11 : i64} {
  func.func @_conv_mm_kernel(%arg0: i32, %arg1: i32, %arg2: memref<1x16x7xf32, #tpu.memory_space<vmem>>, %arg3: memref<32x16xf32, #tpu.memory_space<vmem>>, %arg4: memref<32x1xf32, #tpu.memory_space<vmem>>, %arg5: memref<1x32x7xf32, #tpu.memory_space<vmem>>) attributes {dimension_semantics = [#tpu.dimension_semantics<parallel>, #tpu.dimension_semantics<parallel>], iteration_bounds = array<i64: 2, 1>, scalar_prefetch = 0 : i64, scratch_operands = 0 : i64, tpu.core_type = #tpu.core_type<tc>, window_params = [{transform_indices = @transform_0, window_bounds = array<i64: 1, 16, 7>}, {pipeline_mode = #tpu.pipeline_mode<synchronous>, transform_indices = @transform_1, window_bounds = array<i64: 32, 16>}, {pipeline_mode = #tpu.pipeline_mode<synchronous>, transform_indices = @transform_2, window_bounds = array<i64: 32, 1>}, {transform_indices = @transform_3, window_bounds = array<i64: 1, 32, 7>}]} {
    %c0 = arith.constant 0 : index
    %c0_0 = arith.constant 0 : index
    %0 = vector.load %arg3[%c0, %c0_0] : memref<32x16xf32, #tpu.memory_space<vmem>>, vector<32x16xf32>
    %c0_1 = arith.constant 0 : index
    %c0_2 = arith.constant 0 : index
    %c0_3 = arith.constant 0 : index
    %1 = vector.load %arg2[%c0_1, %c0_2, %c0_3] : memref<1x16x7xf32, #tpu.memory_space<vmem>>, vector<1x16x7xf32>
    %2 = vector.shape_cast %1 : vector<1x16x7xf32> to vector<16x7xf32>
    %cst = arith.constant dense<0.000000e+00> : vector<32x7xf32>
    %3 = tpu.matmul %0, %2, %cst {dimension_numbers = #tpu.dot_dimension_numbers<[1], [0], [0], [1], [0, 0, 1, 1], [], []>} : vector<32x16xf32>, vector<16x7xf32>, vector<32x7xf32> -> vector<32x7xf32>
    %c0_4 = arith.constant 0 : index
    %c0_5 = arith.constant 0 : index
    %4 = vector.load %arg4[%c0_4, %c0_5] : memref<32x1xf32, #tpu.memory_space<vmem>>, vector<32x1xf32>
    %5 = vector.broadcast %4 : vector<32x1xf32> to vector<32x7xf32>
    %6 = arith.addf %3, %5 : vector<32x7xf32>
    %c0_6 = arith.constant 0 : index
    %c0_7 = arith.constant 0 : index
    %c0_8 = arith.constant 0 : index
    %7 = vector.load %arg5[%c0_6, %c0_7, %c0_8] : memref<1x32x7xf32, #tpu.memory_space<vmem>>, vector<1x32x7xf32>
    %8 = vector.shape_cast %7 : vector<1x32x7xf32> to vector<32x7xf32>
    %9 = vector.shape_cast %6 : vector<32x7xf32> to vector<1x32x7xf32>
    tpu.vector_store %arg5[%c0_6, %c0_7, %c0_8], %9 {strides = array<i32>} : memref<1x32x7xf32, #tpu.memory_space<vmem>>, vector<1x32x7xf32>,
    return
  }
  func.func @transform_0(%arg0: i32, %arg1: i32) -> (i32, i32, i32) {
    %c0_i32 = arith.constant 0 : i32
    %c0_i32_0 = arith.constant 0 : i32
    return %arg0, %c0_i32, %arg1 : i32, i32, i32
  }
  func.func @transform_1(%arg0: i32, %arg1: i32) -> (i32, i32) {
    %c0_i32 = arith.constant 0 : i32
    %c0_i32_0 = arith.constant 0 : i32
    %c0_i32_1 = arith.constant 0 : i32
    return %c0_i32, %c0_i32_0 : i32, i32
  }
  func.func @transform_2(%arg0: i32, %arg1: i32) -> (i32, i32) {
    %c0_i32 = arith.constant 0 : i32
    %c0_i32_0 = arith.constant 0 : i32
    %c0_i32_1 = arith.constant 0 : i32
    return %c0_i32, %c0_i32_0 : i32, i32
  }
  func.func @transform_3(%arg0: i32, %arg1: i32) -> (i32, i32, i32) {
    %c0_i32 = arith.constant 0 : i32
    %c0_i32_0 = arith.constant 0 : i32
    return %arg0, %c0_i32, %arg1 : i32, i32, i32
  }
}

</mosaic_0001>

<llo_original>
// kernel: conv1d_block_forward.1
$region0: #{conv1d_block_forward.1}
  #allocation0 [shape = 'u32[]', space=smem, size = 0x4, offset = 0x4, fixed_abs, tag = 'smem constant byte address 0x4 - core index']
  #allocation1 [shape = 'u32[144,128]{1,0:T(1,128)}', space=vmem, size = 0x12000, scoped, tag = 'internal scratch']
  %s0 = inlined_call_operand.vmem [shape: f32[2,16,7], index: 0, kind: input, shape index: {}]
  %s1 = inlined_call_operand.vmem [shape: f32[32,16], index: 1, kind: input, shape index: {}]
  %s2 = inlined_call_operand.vmem [shape: f32[32,1], index: 2, kind: input, shape index: {}]
  %s3 = inlined_call_operand.vmem [shape: f32[2,32,7], index: 3, kind: output, shape index: {}]
  %s4 = sld [smem:[#allocation0]]
  $region45: #{conv1d_block_forward.1} parent=0
    _
  %s6 = ssub.s32 1, %s4
  %s7 = scalar_select 0, %s6, %s4
  loop: start=0, step=1, limit=4
  $region2: #{conv1d_block_forward.1} parent=0 // loop_pre_header
    _
  $region3: #{conv1d_block_forward.1} parent=0 // loop_header
    %s9 = sphi 0, %s13
    %p10 = scmp.ge.s32.totalorder %s9, 4
    %s16 = sphi 0, %s28
    %s17 = sphi 0, %s24
    %s18 = sphi 0, %s16
    %s19 = sphi 0, %s17
    %s20 = sphi 0, %s18
    %s21 = sphi 0, %s19
    %s33 = sphi 0, %s35
    %s36 = sphi 0, %s33
    %s37 = sphi 0, %s36
    %s53 = sphi 0, %s37
    %s57 = sphi 0, %s57
    %s59 = sphi 0, %s57
    %s60 = sphi 0, %s59
    %s74 = sphi 0, %s60
    %s78 = sphi 0, %s78
    %s80 = sphi 0, %s78
    %s81 = sphi 0, %s80
    %s95 = sphi 0, %s81
    %s103 = sphi 0, %s105
    %s106 = sphi 0, %s103
    %s107 = sphi 0, %s106
    %s123 = sphi 0, %s107
  $region4: #{conv1d_block_forward.1} parent=0 // loop_header_branch
    %12 = sbr.rel (%p10) target = $region8
  $region5: #{conv1d_block_forward.1} parent=0 // loop_body
    %s14 = ssub.s32 %s9, 1
    %s15 = ssub.s32 %s9, 2
    %s22 = sadd.s32 1, %s17
    %p23 = scmp.ge.s32.totalorder %s22, 1
    %s24 = scalar_select %p23, 0, %s22
    %s25 = sadd.s32 1, %s16
    %s26 = scalar_select %p23, %s25, %s16
    %p27 = scmp.ge.s32.totalorder %s26, 2
    %s28 = scalar_select %p27, 0, %s26
    %s29 = ssub.s32 %s16, %s28
    %s30 = ssub.s32 %s17, %s24
    %s31 = sor.u32 %s29, %s30
    %p32 = scmp.eq.s32.totalorder %s31, 0
    %s34 = sadd.s32 %s33, 1
    %s35 = scalar_select %p32, %s33, %s34
    %p38 = pneg %p32
    %p39 = scmp.eq.s32.totalorder %s9, 1
    %p40 = por %p38, %p39
    %p41 = scmp.ne.s32.totalorder %s33, %s36
    %p42 = scmp.eq.s32.totalorder %s9, 0
    %p43 = por %p41, %p42
    %p44 = scmp.ne.s32.totalorder %s33, %s36
    %p45 = scmp.eq.s32.totalorder %s14, 1
    %p46 = por %p44, %p45
    %p47 = scmp.ne.s32.totalorder %s36, %s37
    %p48 = scmp.eq.s32.totalorder %s14, 0
    %p49 = por %p47, %p48
    %p50 = scmp.ne.s32.totalorder %s36, %s37
    %p51 = scmp.eq.s32.totalorder %s15, 1
    %p52 = por %p50, %p51
    %p54 = scmp.ne.s32.totalorder %s37, %s53
    %p55 = scmp.eq.s32.totalorder %s15, 0
    %p56 = por %p54, %p55
    %s58 = sadd.s32 %s57, 1
    %p61 = scmp.eq.s32.totalorder %s9, 1
    %p62 = scmp.ne.s32.totalorder %s57, %s59
    %p63 = scmp.eq.s32.totalorder %s9, 0
    %p64 = por %p62, %p63
    %p65 = scmp.ne.s32.totalorder %s57, %s59
    %p66 = scmp.eq.s32.totalorder %s14, 1
    %p67 = por %p65, %p66
    %p68 = scmp.ne.s32.totalorder %s59, %s60
    %p69 = scmp.eq.s32.totalorder %s14, 0
    %p70 = por %p68, %p69
    %p71 = scmp.ne.s32.totalorder %s59, %s60
    %p72 = scmp.eq.s32.totalorder %s15, 1
    %p73 = por %p71, %p72
    %p75 = scmp.ne.s32.totalorder %s60, %s74
    %p76 = scmp.eq.s32.totalorder %s15, 0
    %p77 = por %p75, %p76
    %s79 = sadd.s32 %s78, 1
    %p82 = scmp.eq.s32.totalorder %s9, 1
    %p83 = scmp.ne.s32.totalorder %s78, %s80
    %p84 = scmp.eq.s32.totalorder %s9, 0
    %p85 = por %p83, %p84
    %p86 = scmp.ne.s32.totalorder %s78, %s80
    %p87 = scmp.eq.s32.totalorder %s14, 1
    %p88 = por %p86, %p87
    %p89 = scmp.ne.s32.totalorder %s80, %s81
    %p90 = scmp.eq.s32.totalorder %s14, 0
    %p91 = por %p89, %p90
    %p92 = scmp.ne.s32.totalorder %s80, %s81
    %p93 = scmp.eq.s32.totalorder %s15, 1
    %p94 = por %p92, %p93
    %p96 = scmp.ne.s32.totalorder %s81, %s95
    %p97 = scmp.eq.s32.totalorder %s15, 0
    %p98 = por %p96, %p97
    %s99 = ssub.s32 %s16, %s28
    %s100 = ssub.s32 %s17, %s24
    %s101 = sor.u32 %s99, %s100
    %p102 = scmp.eq.s32.totalorder %s101, 0
    %s104 = sadd.s32 %s103, 1
    %s105 = scalar_select %p102, %s103, %s104
    %p108 = pneg %p102
    %p109 = scmp.eq.s32.totalorder %s9, 1
    %p110 = por %p108, %p109
    %p111 = scmp.ne.s32.totalorder %s103, %s106
    %p112 = scmp.eq.s32.totalorder %s9, 0
    %p113 = por %p111, %p112
    %p114 = scmp.ne.s32.totalorder %s103, %s106
    %p115 = scmp.eq.s32.totalorder %s14, 1
    %p116 = por %p114, %p115
    %p117 = scmp.ne.s32.totalorder %s106, %s107
    %p118 = scmp.eq.s32.totalorder %s14, 0
    %p119 = por %p117, %p118
    %p120 = scmp.ne.s32.totalorder %s106, %s107
    %p121 = scmp.eq.s32.totalorder %s15, 1
    %p122 = por %p120, %p121
    %p124 = scmp.ne.s32.totalorder %s107, %s123
    %p125 = scmp.eq.s32.totalorder %s15, 0
    %p126 = por %p124, %p125
    %p127 = scmp.le.s32.totalorder 1, %s9
    %p128 = scmp.lt.s32.totalorder %s9, 3
    %p129 = pnand %p127, %p128
    %p130 = pneg %p129
    // Predicated region
    $region9: #{conv1d_block_forward.1} parent=5 // pred_check
      _
    $region10: #{conv1d_block_forward.1} parent=5 // pred_check_branch
      %132 = sbr.rel (%p129) target = $region12
    $region11: #{conv1d_block_forward.1} parent=5 // pred_region
      %s133 = ssub.s32 %s9, 1
      // Predicated region
      $region13: #{conv1d_block_forward.1} parent=11 // pred_check
        %p134 = pneg %p70
      $region14: #{conv1d_block_forward.1} parent=11 // pred_check_branch
        %136 = sbr.rel (%p134) target = $region16
      $region15: #{conv1d_block_forward.1} parent=11 // pred_region
        _
      $region16: #{conv1d_block_forward.1} parent=11 // pred_fallthru
        _
      // Predicated region
      $region17: #{conv1d_block_forward.1} parent=11 // pred_check
        %p137 = pneg %p91
      $region18: #{conv1d_block_forward.1} parent=11 // pred_check_branch
        %139 = sbr.rel (%p137) target = $region20
      $region19: #{conv1d_block_forward.1} parent=11 // pred_region
        _
      $region20: #{conv1d_block_forward.1} parent=11 // pred_fallthru
        _
    $region12: #{conv1d_block_forward.1} parent=5 // pred_fallthru
      _
    %p140 = scmp.lt.s32.totalorder %s9, 2
    // Predicated region
    $region21: #{conv1d_block_forward.1} parent=5 // pred_check
      %p141 = pneg %p140
    $region22: #{conv1d_block_forward.1} parent=5 // pred_check_branch
      %143 = sbr.rel (%p141) target = $region24
    $region23: #{conv1d_block_forward.1} parent=5 // pred_region
      // Predicated region
      $region25: #{conv1d_block_forward.1} parent=23 // pred_check
        %p144 = pneg %p43
      $region26: #{conv1d_block_forward.1} parent=23 // pred_check_branch
        %146 = sbr.rel (%p144) target = $region28
      $region27: #{conv1d_block_forward.1} parent=23 // pred_region
        %p147 = scmp.lt.s32.totalorder %s16, 1
        %s148 = scalar_select %p147, %s16, 1
        %p149 = scmp.lt.s32.totalorder %s17, 0
        %s150 = scalar_select %p149, %s17, 0
        %s151 = smul.addr %s148, 2
        %s152 = sadd.s32 %s150, %s151
        %s153 = smul.addr %s152, 8
        %s154 = scalar_lea.vmem %s0, %s153
      $region28: #{conv1d_block_forward.1} parent=23 // pred_fallthru
        _
    $region24: #{conv1d_block_forward.1} parent=5 // pred_fallthru
      _
    %p155 = scmp.le.s32.totalorder 1, %s9
    %p156 = scmp.lt.s32.totalorder %s9, 3
    %p157 = pnand %p155, %p156
    %p158 = pneg %p157
    // Predicated region
    $region29: #{conv1d_block_forward.1} parent=5 // pred_check
      _
    $region30: #{conv1d_block_forward.1} parent=5 // pred_check_branch
      %160 = sbr.rel (%p157) target = $region32
    $region31: #{conv1d_block_forward.1} parent=5 // pred_region
      %s161 = ssub.s32 %s9, 1
      %p162 = scmp.lt.s32.totalorder %s18, 1
      %s163 = scalar_select %p162, %s18, 1
      %p164 = scmp.lt.s32.totalorder %s19, 0
      %s165 = scalar_select %p164, %s19, 0
      %s166 = smul.addr %s163, 2
      %s167 = sadd.s32 %s165, %s166
      %s168 = smul.addr %s167, 8
      %s169 = scalar_lea.vmem %s0, %s168
      %p170 = pneg %p49
      %p171 = pneg %p46
      %p172 = pneg %p70
      %p173 = pneg %p67
      %p174 = pneg %p91
      %p175 = pneg %p88
      %p176 = pneg %p119
      %p177 = pneg %p116
      %p178 = scmp.lt.s32.totalorder %s18, 1
      %s179 = scalar_select %p178, %s18, 1
      %p180 = scmp.lt.s32.totalorder %s19, 0
      %s181 = scalar_select %p180, %s19, 0
      %s182 = smul.addr %s179, 4
      %s183 = sadd.s32 %s181, %s182
      %s184 = smul.addr %s183, 8
      %s185 = scalar_lea.vmem %s3, %s184
      %p186 = scmp.lt.s32.totalorder %s18, 1
      %s187 = scalar_select %p186, %s18, 1
      %p188 = scmp.lt.s32.totalorder %s19, 0
      %s189 = scalar_select %p188, %s19, 0
      %s190 = smul.addr %s187, 2
      %s191 = sadd.s32 %s189, %s190
      %s192 = smul.addr %s191, 8
      %s193 = scalar_lea.vmem %s0, %s192
      %p194 = scmp.lt.s32.totalorder %s18, 1
      %s195 = scalar_select %p194, %s18, 1
      %p196 = scmp.lt.s32.totalorder %s19, 0
      %s197 = scalar_select %p196, %s19, 0
      %s198 = smul.addr %s195, 4
      %s199 = sadd.s32 %s197, %s198
      %s200 = smul.addr %s199, 8
      %s201 = scalar_lea.vmem %s3, %s200
      %v202 = vld [vmem:[%s1] sm:$0xff]
      %v203 = vld [vmem:[%s1 + $0x8] sm:$0xff]
      %v204 = vld [vmem:[%s1 + $0x10] sm:$0xff]
      %v205 = vld [vmem:[%s1 + $0x18] sm:$0xff]
      %v206 = vld [vmem:[%s193] sm:$0xff]
      %v207 = vld [vmem:[%s193 + $0x8] sm:$0xff]
      %v208 = vld [vmem:[%s2] sm:$0xff]
      %v209 = vld [vmem:[%s2 + $0x8] sm:$0xff]
      %v210 = vld [vmem:[%s2 + $0x10] sm:$0xff]
      %v211 = vld [vmem:[%s2 + $0x18] sm:$0xff]
      %213 = vset.pattern.permute.xlu0 0
      %214 = vperm.xlu0 %213, %v208
      %v215 = vpop.permute.xlu0 %214
      %218 = vset.pattern.permute.xlu0 0
      %219 = vperm.xlu0 %218, %v209
      %v220 = vpop.permute.xlu0 %219
      %223 = vset.pattern.permute.xlu0 0
      %224 = vperm.xlu0 %223, %v210
      %v225 = vpop.permute.xlu0 %224
      %228 = vset.pattern.permute.xlu0 0
      %229 = vperm.xlu0 %228, %v211
      %v230 = vpop.permute.xlu0 %229
      %vm232 = vcmask 130048
      %v234 = vsel %vm232, %v202, 0
      %v237 = vsel %vm232, %v203, 0
      %v240 = vsel %vm232, %v204, 0
      %v243 = vsel %vm232, %v205, 0
      %245 = vmatprep.subr.mxu0 0.0
      %246 = vmatpush1.msra.mxu0 %v206
      %247 = vmatprep.subr.mxu0 0.0
      %248 = vmatpush1.msra.mxu0 %v207
      %249 = vmatprep.subr.mxu0 0.0
      %250 = vmatpush1.msra.mxu0 0.0
      %251 = vmatprep.subr.mxu0 0.0
      %252 = vmatpush1.msra.mxu0 0.0
      %253 = vmatprep.subr.mxu0 0.0
      %254 = vmatpush1.msra.mxu0 0.0
      %255 = vmatprep.subr.mxu0 0.0
      %256 = vmatpush1.msra.mxu0 0.0
      %257 = vmatprep.subr.mxu0 0.0
      %258 = vmatpush1.msra.mxu0 0.0
      %259 = vmatprep.subr.mxu0 0.0
      %260 = vmatpush1.msra.mxu0 0.0
      %261 = vmatprep.subr.mxu0 0.0
      %262 = vmatpush1.msra.mxu0 0.0
      %263 = vmatprep.subr.mxu0 0.0
      %264 = vmatpush1.msra.mxu0 0.0
      %265 = vmatprep.subr.mxu0 0.0
      %266 = vmatpush1.msra.mxu0 0.0
      %267 = vmatprep.subr.mxu0 0.0
      %268 = vmatpush1.msra.mxu0 0.0
      %269 = vmatprep.subr.mxu0 0.0
      %270 = vmatpush1.msra.mxu0 0.0
      %271 = vmatprep.subr.mxu0 0.0
      %272 = vmatpush1.msra.mxu0 0.0
      %273 = vmatprep.subr.mxu0 0.0
      %274 = vmatpush1.msra.mxu0 0.0
      %275 = vmatprep.subr.mxu0 0.0
      %276 = vmatpush1.msra.mxu0 0.0
      %277 = vmatprep.subr.mxu0 0.0
      %278 = vmatpush1.msra.mxu0 0.0
      %279 = vmatprep.subr.mxu0 0.0
      %280 = vmatpush1.msra.mxu0 0.0
      %281 = vmatprep.subr.mxu0 0.0
      %282 = vmatpush1.msra.mxu0 0.0
      %283 = vmatprep.subr.mxu0 0.0
      %284 = vmatpush1.msra.mxu0 0.0
      %285 = vmatprep.subr.mxu0 0.0
      %286 = vmatpush1.msra.mxu0 0.0
      %287 = vmatprep.subr.mxu0 0.0
      %288 = vmatpush1.msra.mxu0 0.0
      %289 = vmatprep.subr.mxu0 0.0
      %290 = vmatpush1.msra.mxu0 0.0
      %291 = vmatprep.subr.mxu0 0.0
      %292 = vmatpush1.msra.mxu0 0.0
      %293 = vmatprep.subr.mxu0 0.0
      %294 = vmatpush1.msra.mxu0 0.0
      %295 = vmatprep.subr.mxu0 0.0
      %296 = vmatpush1.msra.mxu0 0.0
      %297 = vmatprep.subr.mxu0 0.0
      %298 = vmatpush1.msra.mxu0 0.0
      %299 = vmatprep.subr.mxu0 0.0
      %300 = vmatpush1.msra.mxu0 0.0
      %301 = vmatprep.subr.mxu0 0.0
      %302 = vmatpush1.msra.mxu0 0.0
      %303 = vmatprep.subr.mxu0 0.0
      %304 = vmatpush1.msra.mxu0 0.0
      %305 = vmatprep.subr.mxu0 0.0
      %306 = vmatpush1.msra.mxu0 0.0
      %307 = vmatprep.subr.mxu0 0.0
      %308 = vmatpush1.msra.mxu0 0.0
      %309 = vmatprep.mubr.f32.mxu0 0.0
      %310 = vmatmul.mubr.f32.gmra.mrb[0].mxu0 %v234
      %v311 = vpop.f32.mrb[0].mxu0
      %v312 = vadd.f32 %v215, %v311
      %v313 = vpop.f32.mrb[0].mxu0
      %314 = vmatprep.mubr.f32.mxu0 0.0
      %315 = vmatmul.mubr.f32.gmra.mrb[0].mxu0 %v237
      %v316 = vpop.f32.mrb[0].mxu0
      %v317 = vadd.f32 %v220, %v316
      %v318 = vpop.f32.mrb[0].mxu0
      %319 = vmatprep.mubr.f32.mxu0 0.0
      %320 = vmatmul.mubr.f32.gmra.mrb[0].mxu0 %v240
      %v321 = vpop.f32.mrb[0].mxu0
      %v322 = vadd.f32 %v225, %v321
      %v323 = vpop.f32.mrb[0].mxu0
      %324 = vmatprep.mubr.f32.mxu0 0.0
      %325 = vmatmul.mubr.f32.gmra.mrb[0].mxu0 %v243
      %v326 = vpop.f32.mrb[0].mxu0
      %v327 = vadd.f32 %v230, %v326
      %v328 = vpop.f32.mrb[0].mxu0
      %329 = vdwg.mxu0
      %vm330 = vcmask 56320
      %331 = vst.msk [vmem:[%s201] sm:$0xff] %vm330, %v312
      %332 = vst.msk [vmem:[%s201 + $0x8] sm:$0xff] %vm330, %v317
      %333 = vst.msk [vmem:[%s201 + $0x10] sm:$0xff] %vm330, %v322
      %334 = vst.msk [vmem:[%s201 + $0x18] sm:$0xff] %vm330, %v327
      %p335 = scmp.lt.s32.totalorder %s18, 1
      %s336 = scalar_select %p335, %s18, 1
      %p337 = scmp.lt.s32.totalorder %s19, 0
      %s338 = scalar_select %p337, %s19, 0
      %s339 = smul.addr %s336, 4
      %s340 = sadd.s32 %s338, %s339
      %s341 = smul.addr %s340, 8
      %s342 = scalar_lea.vmem %s3, %s341
      // Predicated region
      $region33: #{conv1d_block_forward.1} parent=31 // pred_check
        %p343 = pneg %p116
      $region34: #{conv1d_block_forward.1} parent=31 // pred_check_branch
        %345 = sbr.rel (%p343) target = $region36
      $region35: #{conv1d_block_forward.1} parent=31 // pred_region
        _
      $region36: #{conv1d_block_forward.1} parent=31 // pred_fallthru
        _
    $region32: #{conv1d_block_forward.1} parent=5 // pred_fallthru
      _
    %p346 = scmp.le.s32.totalorder 2, %s9
    // Predicated region
    $region37: #{conv1d_block_forward.1} parent=5 // pred_check
      %p347 = pneg %p346
    $region38: #{conv1d_block_forward.1} parent=5 // pred_check_branch
      %349 = sbr.rel (%p347) target = $region40
    $region39: #{conv1d_block_forward.1} parent=5 // pred_region
      %s350 = ssub.s32 %s9, 2
      // Predicated region
      $region41: #{conv1d_block_forward.1} parent=39 // pred_check
        %p351 = pneg %p122
      $region42: #{conv1d_block_forward.1} parent=39 // pred_check_branch
        %353 = sbr.rel (%p351) target = $region44
      $region43: #{conv1d_block_forward.1} parent=39 // pred_region
        %p354 = scmp.lt.s32.totalorder %s20, 1
        %s355 = scalar_select %p354, %s20, 1
        %p356 = scmp.lt.s32.totalorder %s21, 0
        %s357 = scalar_select %p356, %s21, 0
        %s358 = smul.addr %s355, 4
        %s359 = sadd.s32 %s357, %s358
        %s360 = smul.addr %s359, 8
        %s361 = scalar_lea.vmem %s3, %s360
      $region44: #{conv1d_block_forward.1} parent=39 // pred_fallthru
        _
    $region40: #{conv1d_block_forward.1} parent=5 // pred_fallthru
      _
  $region6: #{conv1d_block_forward.1} parent=0 // loop_footer
    %s13 = sadd.s32 1, %s9
  $region7: #{conv1d_block_forward.1} parent=0 // loop_footer_branch
    %8 = sbr.rel target = $region3
  $region8: #{conv1d_block_forward.1} parent=0 // loop_exit
    _

</llo_original>
